<compile_context>
chip_gen: v5e
topology: v5e:2x2
jax: 0.10.0
libtpu: 0.0.40
codegen_flags: <defaults>
</compile_context>

<pallas_src>
import jax
import jax.numpy as jnp
from jax import lax
from jax.experimental import pallas as pl
from jax.experimental.pallas import tpu as pltpu


def skipgram_sm_kernel(x_ref, w_ref, out_ref):
    # x_ref:   (TB, D)  bf16 -- batch tile of gathered center embeddings
    # w_ref:   (TV, D)  bf16 -- vocab tile of the linear weight (PyTorch layout)
    # out_ref: (TB, TV) f32  -- logits tile
    out_ref[...] = lax.dot_general(
        x_ref[...], w_ref[...],
        dimension_numbers=(((1,), (1,)), ((), ())),   # contract on D; no transpose
        preferred_element_type=jnp.float32,
    ).astype(out_ref.dtype)


def _round_up(x, m):
    return ((x + m - 1) // m) * m


def skipgram_sm_forward(center, emb_table, linear_w, *, tb=512, tv=4096,
                        compute_dtype=jnp.bfloat16,
                        vmem_budget_bytes=40 * 1024 * 1024):
    """Skipgram_SM forward: logits = emb_table[center] @ linear_w.T.

    center: (B,) integer indices; emb_table: (V, D); linear_w: (V, D).
    Returns (B, V) f32 logits.
    """
    B = center.shape[0]
    V, D = emb_table.shape
    assert linear_w.shape == (V, D)

    # Embedding gather hoisted out of the kernel (cheap row gather); the kernel
    # then sees only the (B, D) activations -- indices never enter VMEM.
    x = jnp.take(emb_table, center.astype(jnp.int32), axis=0)          # (B, D)

    # bf16 streaming of activations and weights (f32 accumulation in-kernel).
    # In production keep linear_w stored in bf16 so this cast is a no-op.
    if x.dtype != compute_dtype:
        x = x.astype(compute_dtype)
    w = linear_w if linear_w.dtype == compute_dtype else linear_w.astype(compute_dtype)

    itemsize = jnp.dtype(compute_dtype).itemsize
    # bf16 sublane tile is (16, 128) -> batch tile must be a multiple of 16.
    sub = 16 if itemsize == 2 else 8

    # Tile sizes: as large as the (padded) problem allows, capped by a VMEM
    # budget for the double-buffered working set (inputs + f32 output tile).
    tb = min(tb, _round_up(B, sub))
    tb = max(sub, _round_up(tb, sub))
    tv = min(tv, _round_up(V, 128))
    tv = max(128, _round_up(tv, 128))

    def working_set(tb_, tv_):
        # double-buffered x tile + w tile + f32 out tile
        return 2 * (tb_ * D * itemsize + tv_ * D * itemsize + tb_ * tv_ * 4)

    # Shrink vocab tile first (output tile dominates VMEM), then batch tile.
    while tv > 128 and working_set(tb, tv) > vmem_budget_bytes:
        tv = max(128, ((tv // 2) // 128) * 128)
    while tb > sub and working_set(tb, tv) > vmem_budget_bytes:
        tb = max(sub, ((tb // 2) // sub) * sub)

    Bp = _round_up(B, tb)
    Vp = _round_up(V, tv)

    # Zero-pad up to the tile grid (padded rows/cols are sliced off below).
    if Bp != B:
        x = jnp.pad(x, ((0, Bp - B), (0, 0)))
    if Vp != V:
        # Prefer tv | V (or hoist this pad out of the per-call hot path) to
        # avoid materializing a padded copy of the full weight every call.
        w = jnp.pad(w, ((0, Vp - V), (0, 0)))

    nv, nb = Vp // tv, Bp // tb

    cost = pl.CostEstimate(
        flops=2 * Bp * Vp * D,
        transcendentals=0,
        bytes_accessed=Bp * D * itemsize + Vp * D * itemsize + Bp * Vp * 4,
    )
    vmem_limit = int(min(working_set(tb, tv) + (4 << 20), 64 << 20))

    out = pl.pallas_call(
        skipgram_sm_kernel,
        out_shape=jax.ShapeDtypeStruct((Bp, Vp), jnp.float32),
        # Vocab OUTER (megacore-sharded weight stream), batch INNER: the weight
        # block index is constant across the inner batch sweep, so each W tile
        # is DMA'd from HBM exactly once.
        grid=(nv, nb),
        in_specs=[
            pl.BlockSpec((tb, D), lambda i, j: (j, 0)),   # activation tile (tiny, re-fetch ok)
            pl.BlockSpec((tv, D), lambda i, j: (i, 0)),   # weight tile (streamed once over vocab)
        ],
        out_specs=pl.BlockSpec((tb, tv), lambda i, j: (j, i)),
        compiler_params=pltpu.CompilerParams(
            dimension_semantics=("parallel", "parallel"),
            vmem_limit_bytes=vmem_limit,
        ),
        cost_estimate=cost,
    )(x, w)
    return out[:B, :V]


if __name__ == "__main__":
    # Small, deterministic synthetic setup (no checkpoint loading).
    vocab_size = 256
    embedding_dim = 128
    batch = 16

    key = jax.random.PRNGKey(0)
    k_emb, k_w, k_idx = jax.random.split(key, 3)

    # nn.Embedding default init ~ N(0, 1); nn.Linear weight ~ U(-1/sqrt(D), 1/sqrt(D)).
    emb_table = jax.random.normal(k_emb, (vocab_size, embedding_dim), jnp.float32)
    bound = 1.0 / jnp.sqrt(embedding_dim)
    linear_w = jax.random.uniform(k_w, (vocab_size, embedding_dim), jnp.float32,
                                  minval=-bound, maxval=bound)
    center = jax.random.randint(k_idx, (batch,), 0, vocab_size, jnp.int32)

    out = skipgram_sm_forward(center, emb_table, linear_w)
    out = jax.block_until_ready(out)

    # Pure-JAX f32 reference of the PyTorch forward semantics (kernel streams
    # in bf16 with f32 accumulation, so allow ~1e-2 relative differences).
    ref = emb_table[center] @ linear_w.T
    assert out.shape == (batch, vocab_size)
    assert jnp.allclose(out, ref, atol=2e-2, rtol=2e-2), float(jnp.max(jnp.abs(out - ref)))

    print("KERNEL_OK")
</pallas_src>

<mosaic_0001>
module attributes {stable_mosaic.version = 11 : i64} {
  func.func @skipgram_sm_kernel(%arg0: i32, %arg1: i32, %arg2: memref<16x128xbf16, #tpu.memory_space<vmem>>, %arg3: memref<256x128xbf16, #tpu.memory_space<vmem>>, %arg4: memref<16x256xf32, #tpu.memory_space<vmem>>) attributes {dimension_semantics = [#tpu.dimension_semantics<parallel>, #tpu.dimension_semantics<parallel>], iteration_bounds = array<i64: 1, 1>, scalar_prefetch = 0 : i64, scratch_operands = 0 : i64, tpu.core_type = #tpu.core_type<tc>, window_params = [{transform_indices = @transform_0, window_bounds = array<i64: 16, 128>}, {transform_indices = @transform_1, window_bounds = array<i64: 256, 128>}, {transform_indices = @transform_2, window_bounds = array<i64: 16, 256>}]} {
    %c0 = arith.constant 0 : index
    %c0_0 = arith.constant 0 : index
    %0 = vector.load %arg2[%c0, %c0_0] : memref<16x128xbf16, #tpu.memory_space<vmem>>, vector<16x128xbf16>
    %c0_1 = arith.constant 0 : index
    %c0_2 = arith.constant 0 : index
    %1 = vector.load %arg3[%c0_1, %c0_2] : memref<256x128xbf16, #tpu.memory_space<vmem>>, vector<256x128xbf16>
    %cst = arith.constant dense<0.000000e+00> : vector<16x256xf32>
    %2 = tpu.matmul %0, %1, %cst {dimension_numbers = #tpu.dot_dimension_numbers<[1], [1], [0], [0], [0, 0, 1, 0], [], []>} : vector<16x128xbf16>, vector<256x128xbf16>, vector<16x256xf32> -> vector<16x256xf32>
    %c0_3 = arith.constant 0 : index
    %c0_4 = arith.constant 0 : index
    %3 = vector.load %arg4[%c0_3, %c0_4] : memref<16x256xf32, #tpu.memory_space<vmem>>, vector<16x256xf32>
    tpu.vector_store %arg4[%c0_3, %c0_4], %2 {strides = array<i32>} : memref<16x256xf32, #tpu.memory_space<vmem>>, vector<16x256xf32>,
    return
  }
  func.func @transform_0(%arg0: i32, %arg1: i32) -> (i32, i32) {
    %c0_i32 = arith.constant 0 : i32
    %c0_i32_0 = arith.constant 0 : i32
    return %arg1, %c0_i32 : i32, i32
  }
  func.func @transform_1(%arg0: i32, %arg1: i32) -> (i32, i32) {
    %c0_i32 = arith.constant 0 : i32
    %c0_i32_0 = arith.constant 0 : i32
    return %arg0, %c0_i32 : i32, i32
  }
  func.func @transform_2(%arg0: i32, %arg1: i32) -> (i32, i32) {
    %c0_i32 = arith.constant 0 : i32
    return %arg1, %arg0 : i32, i32
  }
}

</mosaic_0001>

<llo_original>
// kernel: tpu_custom_call.1
$region0: #{tpu_custom_call.1}
  #allocation0 [shape = 'u32[]', space=smem, size = 0x4, offset = 0x4, fixed_abs, tag = 'smem constant byte address 0x4 - core index']
  #allocation1 [shape = 'u32[72,128]{1,0:T(1,128)}', space=vmem, size = 0x9000, scoped, tag = 'internal scratch']
  %s0 = inlined_call_operand.hbm [shape: bf16[16,128], index: 0, kind: input, shape index: {}]
  %s1 = inlined_call_operand.hbm [shape: bf16[256,128], index: 1, kind: input, shape index: {}]
  %s2 = inlined_call_operand.hbm [shape: f32[16,256], index: 2, kind: output, shape index: {}]
  %s3 = sld [smem:[#allocation0]]
  $region26: #{tpu_custom_call.1} parent=0
    _
  %s5 = ssub.s32 1, %s3
  %s6 = scalar_select 0, %s5, %s3
  $region1: #{tpu_custom_call.1} parent=0
    #allocation2 [shape = 'u8[4096]{0}', space=vmem, size = 0x1000, scoped, tag = 'input window, operand 0, single buffered']
    #allocation3 [shape = 's32[1]{0}', space=sflag, size = 0x4, scoped, tag = 'scoped memory for tpu_custom_call.1']
    #allocation4 [shape = 's32[1]{0}', space=sflag, size = 0x4, scoped, tag = 'scoped memory for tpu_custom_call.1']
    #allocation5 [shape = 'u8[65536]{0}', space=vmem, size = 0x10000, scoped, tag = 'input window, operand 1, single buffered']
    #allocation6 [shape = 's32[1]{0}', space=sflag, size = 0x4, scoped, tag = 'scoped memory for tpu_custom_call.1']
    #allocation7 [shape = 'u8[16384]{0}', space=vmem, size = 0x4000, scoped, tag = 'output window, operand 0, single buffered']
    %7 = vsyncpa [#allocation3], 0
    %8 = vsyncpa [#allocation6], 0
    %9 = vsyncpa [#allocation4], 0
    // Predicated region
    $region2: #{tpu_custom_call.1} parent=1 // pred_check
      _
    $region3: #{tpu_custom_call.1} parent=1 // pred_check_branch
      %11 = sbr.rel (0) target = $region5
    $region4: #{tpu_custom_call.1} parent=1 // pred_region
      %13 = vsyncadd [#allocation3], 0
      %s14 = sshll.u32 %s0, 4
      %s15 = int_to_ptr.hbm [resolvable:$true] %s14
      %s16 = sshll.u32 [#allocation2], 4
      %s17 = int_to_ptr.vmem [resolvable:$true] %s16
      %22 = dma.hbm_to_vmem [thread:$0]  %s15, 128, %s17, [#allocation3], 64, 64, 4
    $region5: #{tpu_custom_call.1} parent=1 // pred_fallthru
      _
    // Predicated region
    $region6: #{tpu_custom_call.1} parent=1 // pred_check
      _
    $region7: #{tpu_custom_call.1} parent=1 // pred_check_branch
      %24 = sbr.rel (0) target = $region9
    $region8: #{tpu_custom_call.1} parent=1 // pred_region
      %26 = vsyncadd [#allocation6], 0
      %s27 = sshll.u32 %s1, 4
      %s28 = int_to_ptr.hbm [resolvable:$true] %s27
      %s29 = sshll.u32 [#allocation5], 4
      %s30 = int_to_ptr.vmem [resolvable:$true] %s29
      %35 = dma.hbm_to_vmem [thread:$0]  %s28, 2048, %s30, [#allocation6], 64, 64, 4
    $region9: #{tpu_custom_call.1} parent=1 // pred_fallthru
      _
    // Predicated region
    $region10: #{tpu_custom_call.1} parent=1 // pred_check
      _
    $region11: #{tpu_custom_call.1} parent=1 // pred_check_branch
      %37 = sbr.rel (0) target = $region13
    $region12: #{tpu_custom_call.1} parent=1 // pred_region
      %39 = dma.done [#allocation3], 128
    $region13: #{tpu_custom_call.1} parent=1 // pred_fallthru
      _
    // Predicated region
    $region14: #{tpu_custom_call.1} parent=1 // pred_check
      _
    $region15: #{tpu_custom_call.1} parent=1 // pred_check_branch
      %41 = sbr.rel (0) target = $region17
    $region16: #{tpu_custom_call.1} parent=1 // pred_region
      %43 = dma.done [#allocation6], 2048
    $region17: #{tpu_custom_call.1} parent=1 // pred_fallthru
      _
    %v44 = vld [vmem:[#allocation2] sm:$0xf]
    %v45 = vld [vmem:[#allocation2 + $0x4] sm:$0xf]
    %v46 = vld [vmem:[#allocation5] sm:$0xf]
    %v47 = vld [vmem:[#allocation5 + $0x4] sm:$0xf]
    %v48 = vld [vmem:[#allocation5 + $0x8] sm:$0xf]
    %v49 = vld [vmem:[#allocation5 + $0xc] sm:$0xf]
    %v50 = vld [vmem:[#allocation5 + $0x10] sm:$0xf]
    %v51 = vld [vmem:[#allocation5 + $0x14] sm:$0xf]
    %v52 = vld [vmem:[#allocation5 + $0x18] sm:$0xf]
    %v53 = vld [vmem:[#allocation5 + $0x1c] sm:$0xf]
    %v54 = vld [vmem:[#allocation5 + $0x20] sm:$0xf]
    %v55 = vld [vmem:[#allocation5 + $0x24] sm:$0xf]
    %v56 = vld [vmem:[#allocation5 + $0x28] sm:$0xf]
    %v57 = vld [vmem:[#allocation5 + $0x2c] sm:$0xf]
    %v58 = vld [vmem:[#allocation5 + $0x30] sm:$0xf]
    %v59 = vld [vmem:[#allocation5 + $0x34] sm:$0xf]
    %v60 = vld [vmem:[#allocation5 + $0x38] sm:$0xf]
    %v61 = vld [vmem:[#allocation5 + $0x3c] sm:$0xf]
    %v62 = vld [vmem:[#allocation5 + $0x40] sm:$0xf]
    %v63 = vld [vmem:[#allocation5 + $0x44] sm:$0xf]
    %v64 = vld [vmem:[#allocation5 + $0x48] sm:$0xf]
    %v65 = vld [vmem:[#allocation5 + $0x4c] sm:$0xf]
    %v66 = vld [vmem:[#allocation5 + $0x50] sm:$0xf]
    %v67 = vld [vmem:[#allocation5 + $0x54] sm:$0xf]
    %v68 = vld [vmem:[#allocation5 + $0x58] sm:$0xf]
    %v69 = vld [vmem:[#allocation5 + $0x5c] sm:$0xf]
    %v70 = vld [vmem:[#allocation5 + $0x60] sm:$0xf]
    %v71 = vld [vmem:[#allocation5 + $0x64] sm:$0xf]
    %v72 = vld [vmem:[#allocation5 + $0x68] sm:$0xf]
    %v73 = vld [vmem:[#allocation5 + $0x6c] sm:$0xf]
    %v74 = vld [vmem:[#allocation5 + $0x70] sm:$0xf]
    %v75 = vld [vmem:[#allocation5 + $0x74] sm:$0xf]
    %v76 = vld [vmem:[#allocation5 + $0x78] sm:$0xf]
    %v77 = vld [vmem:[#allocation5 + $0x7c] sm:$0xf]
    %v80 = vunpack.c.l.b16 %v44
    %v81 = vunpack.c.l.b16 %v45
    %v82 = vpack.c.b16 %v81, %v80
    %v116 = vunpack.c.l.b16 %v46
    %v117 = vunpack.c.l.b16 %v47
    %v118 = vunpack.c.l.b16 %v48
    %v119 = vunpack.c.l.b16 %v49
    %v120 = vunpack.c.l.b16 %v50
    %v121 = vunpack.c.l.b16 %v51
    %v122 = vunpack.c.l.b16 %v52
    %v123 = vunpack.c.l.b16 %v53
    %v124 = vunpack.c.l.b16 %v54
    %v125 = vunpack.c.l.b16 %v55
    %v126 = vunpack.c.l.b16 %v56
    %v127 = vunpack.c.l.b16 %v57
    %v128 = vunpack.c.l.b16 %v58
    %v129 = vunpack.c.l.b16 %v59
    %v130 = vunpack.c.l.b16 %v60
    %v131 = vunpack.c.l.b16 %v61
    %v132 = vunpack.c.l.b16 %v62
    %v133 = vunpack.c.l.b16 %v63
    %v134 = vunpack.c.l.b16 %v64
    %v135 = vunpack.c.l.b16 %v65
    %v136 = vunpack.c.l.b16 %v66
    %v137 = vunpack.c.l.b16 %v67
    %v138 = vunpack.c.l.b16 %v68
    %v139 = vunpack.c.l.b16 %v69
    %v140 = vunpack.c.l.b16 %v70
    %v141 = vunpack.c.l.b16 %v71
    %v142 = vunpack.c.l.b16 %v72
    %v143 = vunpack.c.l.b16 %v73
    %v144 = vunpack.c.l.b16 %v74
    %v145 = vunpack.c.l.b16 %v75
    %v146 = vunpack.c.l.b16 %v76
    %v147 = vunpack.c.l.b16 %v77
    %v148 = vpack.c.b16 %v117, %v116
    %v149 = vpack.c.b16 %v119, %v118
    %v150 = vpack.c.b16 %v121, %v120
    %v151 = vpack.c.b16 %v123, %v122
    %v152 = vpack.c.b16 %v125, %v124
    %v153 = vpack.c.b16 %v127, %v126
    %v154 = vpack.c.b16 %v129, %v128
    %v155 = vpack.c.b16 %v131, %v130
    %v156 = vpack.c.b16 %v133, %v132
    %v157 = vpack.c.b16 %v135, %v134
    %v158 = vpack.c.b16 %v137, %v136
    %v159 = vpack.c.b16 %v139, %v138
    %v160 = vpack.c.b16 %v141, %v140
    %v161 = vpack.c.b16 %v143, %v142
    %v162 = vpack.c.b16 %v145, %v144
    %v163 = vpack.c.b16 %v147, %v146
    %180 = vmatpush.bf16.xpose.msra.mxu0 %v155
    %181 = vmatpush.bf16.xpose.msra.mxu0 %v154
    %182 = vmatpush.bf16.xpose.msra.mxu0 %v153
    %183 = vmatpush.bf16.xpose.msra.mxu0 %v152
    %184 = vmatpush.bf16.xpose.msra.mxu0 %v151
    %185 = vmatpush.bf16.xpose.msra.mxu0 %v150
    %186 = vmatpush.bf16.xpose.msra.mxu0 %v149
    %187 = vmatpush.bf16.xpose.msra.mxu0 %v148
    %188 = vmatmul.bf16.gmra.mxu0 %v82
    %v189 = vpop.f32.mrf.mxu0
    %v190 = vadd.f32 0.0, %v189
    %v191 = vpop.f32.mrf.mxu0
    %v192 = vadd.f32 0.0, %v191
    %193 = vdwg.mxu0
    %194 = vmatpush.bf16.xpose.msra.mxu0 %v163
    %195 = vmatpush.bf16.xpose.msra.mxu0 %v162
    %196 = vmatpush.bf16.xpose.msra.mxu0 %v161
    %197 = vmatpush.bf16.xpose.msra.mxu0 %v160
    %198 = vmatpush.bf16.xpose.msra.mxu0 %v159
    %199 = vmatpush.bf16.xpose.msra.mxu0 %v158
    %200 = vmatpush.bf16.xpose.msra.mxu0 %v157
    %201 = vmatpush.bf16.xpose.msra.mxu0 %v156
    %202 = vmatmul.bf16.gmra.mxu0 %v82
    %v203 = vpop.f32.mrf.mxu0
    %v204 = vadd.f32 0.0, %v203
    %v205 = vpop.f32.mrf.mxu0
    %v206 = vadd.f32 0.0, %v205
    %207 = vdwg.mxu0
    %208 = vst [vmem:[#allocation7] sm:$0xff] %v190
    %209 = vst [vmem:[#allocation7 + $0x8] sm:$0xff] %v204
    %210 = vst [vmem:[#allocation7 + $0x10] sm:$0xff] %v192
    %211 = vst [vmem:[#allocation7 + $0x18] sm:$0xff] %v206
    // Predicated region
    $region18: #{tpu_custom_call.1} parent=1 // pred_check
      _
    $region19: #{tpu_custom_call.1} parent=1 // pred_check_branch
      %213 = sbr.rel (0) target = $region21
    $region20: #{tpu_custom_call.1} parent=1 // pred_region
      %215 = vsyncadd [#allocation4], 0
      %s216 = sshll.u32 [#allocation7], 4
      %s217 = int_to_ptr.vmem [resolvable:$true] %s216
      %s218 = sshll.u32 %s2, 4
      %s219 = int_to_ptr.hbm [resolvable:$true] %s218
      %224 = dma.vmem_to_hbm [thread:$0]  %s217, 512, %s219, [#allocation4], 256, 256, 16
    $region21: #{tpu_custom_call.1} parent=1 // pred_fallthru
      _
    // Predicated region
    $region22: #{tpu_custom_call.1} parent=1 // pred_check
      _
    $region23: #{tpu_custom_call.1} parent=1 // pred_check_branch
      %226 = sbr.rel (0) target = $region25
    $region24: #{tpu_custom_call.1} parent=1 // pred_region
      %228 = dma.done [#allocation4], 512
    $region25: #{tpu_custom_call.1} parent=1 // pred_fallthru
      _
    %229 = vsyncpa [#allocation3], 1
    %230 = vsyncpa [#allocation6], 1
    %231 = vsyncpa [#allocation4], 1

</llo_original>
